<compile_context>
chip_gen: v5e
topology: v5e:2x2
jax: 0.10.0
libtpu: 0.0.40
codegen_flags: <defaults>
</compile_context>

<pallas_src>
import functools

import jax
import jax.numpy as jnp
from jax.experimental import pallas as pl
from jax.experimental.pallas import tpu as pltpu

# ----------------------------- model config ---------------------------------
EMBED_DIM = 32
NUM_HEADS = 4
HEAD_DIM = EMBED_DIM // NUM_HEADS
FF_DIM = 64
BATCH = 2
SEQ = 8
LN_EPS = 1e-5

# Kernel inputs (packed once in the wrapper, outside the per-call path):
#   w_qkv : (C, 3C)  bf16   [Wq | Wk | Wv]   fused QKV projection weight
#   w_o   : (C, C)   bf16   output projection
#   w1    : (C, FF)  bf16   FFN linear1
#   w2    : (FF, C)  bf16   FFN linear2
#   vec   : (8, 128) f32    row r (zero padded to 128 lanes):
#            0: [bq|bk|bv]  1: bo  2: b1  3: b2  4: g1  5: be1  6: g2  7: be2


# ----------------------------- kernel helpers -------------------------------
def _layer_norm(x, gamma, beta):
    # Matches nn.LayerNorm (biased variance). x: (N, C); gamma/beta: (1, C).
    mu = jnp.mean(x, axis=-1, keepdims=True)
    var = jnp.mean((x - mu) ** 2, axis=-1, keepdims=True)
    return (x - mu) * jax.lax.rsqrt(var + LN_EPS) * gamma + beta


# ----------------------------- Pallas kernel --------------------------------
def encoder_layer_kernel(x_ref, wqkv_ref, wo_ref, w1_ref, w2_ref, vec_ref,
                         o_ref, *, batch, seq):
    C, D, H, FF = EMBED_DIM, HEAD_DIM, NUM_HEADS, FF_DIM
    BT = batch * seq

    x2 = x_ref[...]                          # (B*T, C)  f32
    vec = vec_ref[...]                       # (8, 128)  f32 bias / LN slab

    # ---- fused QKV projection: one (B*T, C) @ (C, 3C) bf16 MXU matmul ----
    qkv = jnp.dot(x2.astype(jnp.bfloat16), wqkv_ref[...],
                  preferred_element_type=jnp.float32) + vec[0:1, 0:3 * C]

    # ---- multi-head self-attention with heads folded into the batch dim ----
    # Each head slice (B*T, D) -> (B, T, D), stacked over heads -> (H*B, T, D)
    # (leading-dim split + leading-axis concat: no lane/sublane movement).
    def head_batch(col0):
        return jnp.concatenate(
            [qkv[:, col0 + h * D: col0 + (h + 1) * D].reshape(batch, seq, D)
             for h in range(H)], axis=0)

    q = head_batch(0)
    k = head_batch(C)
    v = head_batch(2 * C)

    scale = 1.0 / float(D) ** 0.5
    # One batched scores contraction + one batched context contraction
    # (batch = H*B = 8) instead of the previous 8 per-head matmuls.
    s = jnp.einsum('btd,bsd->bts', q.astype(jnp.bfloat16),
                   k.astype(jnp.bfloat16),
                   preferred_element_type=jnp.float32) * scale     # (H*B, T, T)
    m = jnp.max(s, axis=-1, keepdims=True)
    e = jnp.exp(s - m)
    p = e * pl.reciprocal(jnp.sum(e, axis=-1, keepdims=True), approx=True)
    ctx = jnp.einsum('bts,bsd->btd', p.astype(jnp.bfloat16),
                     v.astype(jnp.bfloat16),
                     preferred_element_type=jnp.float32)           # (H*B, T, D)

    # Re-assemble heads along lanes -> (B*T, C), then a SINGLE full-Wo matmul
    # (replaces the per-head Wo-slice-and-sum accumulation chain).
    ctx2 = jnp.concatenate(
        [ctx[h * batch:(h + 1) * batch].reshape(BT, D) for h in range(H)],
        axis=-1)
    attn = jnp.dot(ctx2.astype(jnp.bfloat16), wo_ref[...],
                   preferred_element_type=jnp.float32) + vec[1:2, 0:C]

    # ---- residual + LayerNorm 1 (f32) ----
    h1 = _layer_norm(x2 + attn, vec[4:5, 0:C], vec[5:6, 0:C])

    # ---- feed-forward: linear2(relu(linear1(h1))) ----
    f = jnp.maximum(
        jnp.dot(h1.astype(jnp.bfloat16), w1_ref[...],
                preferred_element_type=jnp.float32) + vec[2:3, 0:FF],
        0.0)
    f2 = jnp.dot(f.astype(jnp.bfloat16), w2_ref[...],
                 preferred_element_type=jnp.float32) + vec[3:4, 0:C]

    # ---- residual + LayerNorm 2 (f32) ----
    # NOTE: output last dim C=32 < 128 lanes -> masked store; lane-dense
    # output repack deferred per review (marginal at this size).
    o_ref[...] = _layer_norm(h1 + f2, vec[6:7, 0:C], vec[7:8, 0:C])


# ----------------------------- wrapper ---------------------------------------
def pack_params(p):
    """One-time packing of the 17 layer tensors into 5 kernel inputs.

    Runs ONCE (outside the per-call path). Weights are pre-cast to bf16 for
    single-pass MXU matmuls; biases / LN affine params stay f32 in a
    lane-aligned (8, 128) slab.
    """
    w_qkv = jnp.concatenate([p["wq"], p["wk"], p["wv"]],
                            axis=1).astype(jnp.bfloat16)           # (C, 3C)
    w_o = p["wo"].astype(jnp.bfloat16)                             # (C, C)
    w1 = p["w1"].astype(jnp.bfloat16)                              # (C, FF)
    w2 = p["w2"].astype(jnp.bfloat16)                              # (FF, C)

    def row(v):
        v = v.reshape(1, -1).astype(jnp.float32)
        return jnp.pad(v, ((0, 0), (0, 128 - v.shape[1])))

    vec = jnp.concatenate(
        [row(jnp.concatenate([p["bq"], p["bk"], p["bv"]], axis=1)),
         row(p["bo"]), row(p["b1"]), row(p["b2"]),
         row(p["g1"]), row(p["be1"]), row(p["g2"]), row(p["be2"])],
        axis=0)                                                    # (8, 128)
    return w_qkv, w_o, w1, w2, vec


@jax.jit
def transformer_encoder_layer(x, w_qkv, w_o, w1, w2, vec):
    B, T, C = x.shape
    assert C == EMBED_DIM
    BT, H, D, FF = B * T, NUM_HEADS, HEAD_DIM, FF_DIM

    flops = (2 * BT * C * 3 * C                 # fused QKV
             + 2 * B * H * T * T * D * 2        # scores + context
             + 2 * BT * C * C                   # output projection
             + 2 * BT * C * FF * 2)             # FFN (two matmuls)
    transcendentals = B * H * T * T + B * H * T + 2 * BT
    bytes_accessed = (4 * x.size + 4 * vec.size + 4 * BT * C
                      + 2 * (w_qkv.size + w_o.size + w1.size + w2.size))

    out2d = pl.pallas_call(
        functools.partial(encoder_layer_kernel, batch=B, seq=T),
        out_shape=jax.ShapeDtypeStruct((BT, C), jnp.float32),
        in_specs=[pl.BlockSpec(memory_space=pltpu.MemorySpace.VMEM)] * 6,
        out_specs=pl.BlockSpec(memory_space=pltpu.MemorySpace.VMEM),
        cost_estimate=pl.CostEstimate(
            flops=flops,
            transcendentals=transcendentals,
            bytes_accessed=bytes_accessed),
    )(x.reshape(BT, C), w_qkv, w_o, w1, w2, vec)
    return out2d.reshape(B, T, C)


# ----------------------------- pure-JAX reference ----------------------------
def reference_forward(x, p):
    def ln(y, g, b):
        mu = jnp.mean(y, axis=-1, keepdims=True)
        var = jnp.mean((y - mu) ** 2, axis=-1, keepdims=True)
        return (y - mu) / jnp.sqrt(var + LN_EPS) * g + b

    B, T, C = x.shape
    q = x @ p["wq"] + p["bq"]
    k = x @ p["wk"] + p["bk"]
    v = x @ p["wv"] + p["bv"]
    q = q.reshape(B, T, NUM_HEADS, HEAD_DIM).transpose(0, 2, 1, 3)
    k = k.reshape(B, T, NUM_HEADS, HEAD_DIM).transpose(0, 2, 1, 3)
    v = v.reshape(B, T, NUM_HEADS, HEAD_DIM).transpose(0, 2, 1, 3)
    scores = (q @ k.transpose(0, 1, 3, 2)) / (HEAD_DIM ** 0.5)
    attn = jax.nn.softmax(scores, axis=-1)
    ctx = (attn @ v).transpose(0, 2, 1, 3).reshape(B, T, C)
    attn_out = ctx @ p["wo"] + p["bo"]
    h1 = ln(x + attn_out, p["g1"], p["be1"])
    f = jnp.maximum(h1 @ p["w1"] + p["b1"], 0.0)
    f2 = f @ p["w2"] + p["b2"]
    return ln(h1 + f2, p["g2"], p["be2"])


# ----------------------------- main ------------------------------------------
def make_params(key):
    C, FF = EMBED_DIM, FF_DIM
    keys = jax.random.split(key, 16)
    s = 0.05

    def n(k, shape, scale=s):
        return jax.random.normal(k, shape, jnp.float32) * scale

    return {
        "wq": n(keys[0], (C, C)), "wk": n(keys[1], (C, C)),
        "wv": n(keys[2], (C, C)), "wo": n(keys[3], (C, C)),
        "w1": n(keys[4], (C, FF)), "w2": n(keys[5], (FF, C)),
        "bq": n(keys[6], (1, C)), "bk": n(keys[7], (1, C)),
        "bv": n(keys[8], (1, C)), "bo": n(keys[9], (1, C)),
        "b1": n(keys[10], (1, FF)), "b2": n(keys[11], (1, C)),
        "g1": 1.0 + n(keys[12], (1, C), 0.1), "be1": n(keys[13], (1, C), 0.1),
        "g2": 1.0 + n(keys[14], (1, C), 0.1), "be2": n(keys[15], (1, C), 0.1),
    }


if __name__ == "__main__":
    key = jax.random.PRNGKey(0)
    kx, kp = jax.random.split(key)
    x = jax.random.normal(kx, (BATCH, SEQ, EMBED_DIM), jnp.float32)
    params = make_params(kp)

    # One-time parameter packing, hoisted off the per-forward path.
    packed = pack_params(params)
    packed = jax.tree_util.tree_map(jax.block_until_ready, packed)

    out = transformer_encoder_layer(x, *packed)
    out = jax.block_until_ready(out)

    ref = reference_forward(x, params)
    assert out.shape == (BATCH, SEQ, EMBED_DIM)
    # bf16 MXU operands (f32 accumulate) introduce ~1e-3 deviation vs the
    # f32 reference; LayerNorm/softmax stay f32.
    assert jnp.allclose(out, ref, atol=3e-3, rtol=3e-3), "mismatch vs reference"

    print("KERNEL_OK")
</pallas_src>

<mosaic_0001>
module attributes {stable_mosaic.version = 11 : i64} {
  func.func @encoder_layer_kernel(%arg0: memref<16x32xf32, #tpu.memory_space<vmem>>, %arg1: memref<32x96xbf16, #tpu.memory_space<vmem>>, %arg2: memref<32x32xbf16, #tpu.memory_space<vmem>>, %arg3: memref<32x64xbf16, #tpu.memory_space<vmem>>, %arg4: memref<64x32xbf16, #tpu.memory_space<vmem>>, %arg5: memref<8x128xf32, #tpu.memory_space<vmem>>, %arg6: memref<16x32xf32, #tpu.memory_space<vmem>>) attributes {dimension_semantics = [], scalar_prefetch = 0 : i64, scratch_operands = 0 : i64, tpu.core_type = #tpu.core_type<tc>} {
    %c0 = arith.constant 0 : index
    %c0_0 = arith.constant 0 : index
    %0 = vector.load %arg0[%c0, %c0_0] : memref<16x32xf32, #tpu.memory_space<vmem>>, vector<16x32xf32>
    %c0_1 = arith.constant 0 : index
    %c0_2 = arith.constant 0 : index
    %1 = vector.load %arg5[%c0_1, %c0_2] : memref<8x128xf32, #tpu.memory_space<vmem>>, vector<8x128xf32>
    %2 = arith.truncf %0 : vector<16x32xf32> to vector<16x32xbf16>
    %c0_3 = arith.constant 0 : index
    %c0_4 = arith.constant 0 : index
    %3 = vector.load %arg1[%c0_3, %c0_4] : memref<32x96xbf16, #tpu.memory_space<vmem>>, vector<32x96xbf16>
    %cst = arith.constant dense<0.000000e+00> : vector<16x96xf32>
    %4 = tpu.matmul %2, %3, %cst {dimension_numbers = #tpu.dot_dimension_numbers<[1], [0], [0], [1], [0, 0, 1, 1], [], []>} : vector<16x32xbf16>, vector<32x96xbf16>, vector<16x96xf32> -> vector<16x96xf32>
    %5 = vector.extract_strided_slice %1 {offsets = [0, 0], sizes = [1, 96], strides = [1, 1]} : vector<8x128xf32> to vector<1x96xf32>
    %6 = vector.broadcast %5 : vector<1x96xf32> to vector<16x96xf32>
    %7 = arith.addf %4, %6 : vector<16x96xf32>
    %8 = vector.extract_strided_slice %7 {offsets = [0, 0], sizes = [16, 8], strides = [1, 1]} : vector<16x96xf32> to vector<16x8xf32>
    %9 = vector.shape_cast %8 : vector<16x8xf32> to vector<2x8x8xf32>
    %10 = vector.extract_strided_slice %7 {offsets = [0, 8], sizes = [16, 8], strides = [1, 1]} : vector<16x96xf32> to vector<16x8xf32>
    %11 = vector.shape_cast %10 : vector<16x8xf32> to vector<2x8x8xf32>
    %12 = vector.extract_strided_slice %7 {offsets = [0, 16], sizes = [16, 8], strides = [1, 1]} : vector<16x96xf32> to vector<16x8xf32>
    %13 = vector.shape_cast %12 : vector<16x8xf32> to vector<2x8x8xf32>
    %14 = vector.extract_strided_slice %7 {offsets = [0, 24], sizes = [16, 8], strides = [1, 1]} : vector<16x96xf32> to vector<16x8xf32>
    %15 = vector.shape_cast %14 : vector<16x8xf32> to vector<2x8x8xf32>
    %16 = tpu.concatenate %9, %11, %13, %15 in 0 : vector<2x8x8xf32>, vector<2x8x8xf32>, vector<2x8x8xf32>, vector<2x8x8xf32> -> vector<8x8x8xf32>
    %17 = vector.extract_strided_slice %7 {offsets = [0, 32], sizes = [16, 8], strides = [1, 1]} : vector<16x96xf32> to vector<16x8xf32>
    %18 = vector.shape_cast %17 : vector<16x8xf32> to vector<2x8x8xf32>
    %19 = vector.extract_strided_slice %7 {offsets = [0, 40], sizes = [16, 8], strides = [1, 1]} : vector<16x96xf32> to vector<16x8xf32>
    %20 = vector.shape_cast %19 : vector<16x8xf32> to vector<2x8x8xf32>
    %21 = vector.extract_strided_slice %7 {offsets = [0, 48], sizes = [16, 8], strides = [1, 1]} : vector<16x96xf32> to vector<16x8xf32>
    %22 = vector.shape_cast %21 : vector<16x8xf32> to vector<2x8x8xf32>
    %23 = vector.extract_strided_slice %7 {offsets = [0, 56], sizes = [16, 8], strides = [1, 1]} : vector<16x96xf32> to vector<16x8xf32>
    %24 = vector.shape_cast %23 : vector<16x8xf32> to vector<2x8x8xf32>
    %25 = tpu.concatenate %18, %20, %22, %24 in 0 : vector<2x8x8xf32>, vector<2x8x8xf32>, vector<2x8x8xf32>, vector<2x8x8xf32> -> vector<8x8x8xf32>
    %26 = vector.extract_strided_slice %7 {offsets = [0, 64], sizes = [16, 8], strides = [1, 1]} : vector<16x96xf32> to vector<16x8xf32>
    %27 = vector.shape_cast %26 : vector<16x8xf32> to vector<2x8x8xf32>
    %28 = vector.extract_strided_slice %7 {offsets = [0, 72], sizes = [16, 8], strides = [1, 1]} : vector<16x96xf32> to vector<16x8xf32>
    %29 = vector.shape_cast %28 : vector<16x8xf32> to vector<2x8x8xf32>
    %30 = vector.extract_strided_slice %7 {offsets = [0, 80], sizes = [16, 8], strides = [1, 1]} : vector<16x96xf32> to vector<16x8xf32>
    %31 = vector.shape_cast %30 : vector<16x8xf32> to vector<2x8x8xf32>
    %32 = vector.extract_strided_slice %7 {offsets = [0, 88], sizes = [16, 8], strides = [1, 1]} : vector<16x96xf32> to vector<16x8xf32>
    %33 = vector.shape_cast %32 : vector<16x8xf32> to vector<2x8x8xf32>
    %34 = tpu.concatenate %27, %29, %31, %33 in 0 : vector<2x8x8xf32>, vector<2x8x8xf32>, vector<2x8x8xf32>, vector<2x8x8xf32> -> vector<8x8x8xf32>
    %35 = arith.truncf %16 : vector<8x8x8xf32> to vector<8x8x8xbf16>
    %36 = arith.truncf %25 : vector<8x8x8xf32> to vector<8x8x8xbf16>
    "tpu.trace_start"() <{level = 10 : i32, message = "btd,bsd->bts"}> : () -> ()
    %cst_5 = arith.constant dense<0.000000e+00> : vector<8x8x8xf32>
    %37 = tpu.matmul %35, %36, %cst_5 {dimension_numbers = #tpu.dot_dimension_numbers<[2], [2], [1], [1], [0, 0, 0, 1, 1, 1], [0], [0]>} : vector<8x8x8xbf16>, vector<8x8x8xbf16>, vector<8x8x8xf32> -> vector<8x8x8xf32>
    "tpu.trace_stop"() : () -> ()
    %cst_6 = arith.constant 0.353553385 : f32
    %38 = vector.broadcast %cst_6 : f32 to vector<8x8x8xf32>
    %39 = arith.mulf %37, %38 : vector<8x8x8xf32>
    %cst_7 = arith.constant dense<0xFF800000> : vector<8x8xf32>
    %40 = vector.multi_reduction <maximumf>, %39, %cst_7 [2] : vector<8x8x8xf32> to vector<8x8xf32>
    %41 = vector.shape_cast %40 : vector<8x8xf32> to vector<8x8x1xf32>
    %42 = vector.broadcast %41 : vector<8x8x1xf32> to vector<8x8x8xf32>
    %43 = arith.subf %39, %42 : vector<8x8x8xf32>
    %44 = math.exp %43 : vector<8x8x8xf32>
    %cst_8 = arith.constant dense<0.000000e+00> : vector<8x8xf32>
    %45 = vector.multi_reduction <add>, %44, %cst_8 [2] : vector<8x8x8xf32> to vector<8x8xf32>
    %46 = vector.shape_cast %45 : vector<8x8xf32> to vector<8x8x1xf32>
    %47 = tpu.reciprocal %46 {approx = true} : vector<8x8x1xf32> -> vector<8x8x1xf32>
    %48 = vector.broadcast %47 : vector<8x8x1xf32> to vector<8x8x8xf32>
    %49 = arith.mulf %44, %48 : vector<8x8x8xf32>
    %50 = arith.truncf %49 : vector<8x8x8xf32> to vector<8x8x8xbf16>
    %51 = arith.truncf %34 : vector<8x8x8xf32> to vector<8x8x8xbf16>
    "tpu.trace_start"() <{level = 10 : i32, message = "bts,bsd->btd"}> : () -> ()
    %cst_9 = arith.constant dense<0.000000e+00> : vector<8x8x8xf32>
    %52 = tpu.matmul %50, %51, %cst_9 {dimension_numbers = #tpu.dot_dimension_numbers<[2], [1], [1], [2], [0, 0, 0, 1, 1, 2], [0], [0]>} : vector<8x8x8xbf16>, vector<8x8x8xbf16>, vector<8x8x8xf32> -> vector<8x8x8xf32>
    "tpu.trace_stop"() : () -> ()
    %53 = vector.extract_strided_slice %52 {offsets = [0, 0, 0], sizes = [2, 8, 8], strides = [1, 1, 1]} : vector<8x8x8xf32> to vector<2x8x8xf32>
    %54 = vector.shape_cast %53 : vector<2x8x8xf32> to vector<16x8xf32>
    %55 = vector.extract_strided_slice %52 {offsets = [2, 0, 0], sizes = [2, 8, 8], strides = [1, 1, 1]} : vector<8x8x8xf32> to vector<2x8x8xf32>
    %56 = vector.shape_cast %55 : vector<2x8x8xf32> to vector<16x8xf32>
    %57 = vector.extract_strided_slice %52 {offsets = [4, 0, 0], sizes = [2, 8, 8], strides = [1, 1, 1]} : vector<8x8x8xf32> to vector<2x8x8xf32>
    %58 = vector.shape_cast %57 : vector<2x8x8xf32> to vector<16x8xf32>
    %59 = vector.extract_strided_slice %52 {offsets = [6, 0, 0], sizes = [2, 8, 8], strides = [1, 1, 1]} : vector<8x8x8xf32> to vector<2x8x8xf32>
    %60 = vector.shape_cast %59 : vector<2x8x8xf32> to vector<16x8xf32>
    %61 = tpu.concatenate %54, %56, %58, %60 in 1 : vector<16x8xf32>, vector<16x8xf32>, vector<16x8xf32>, vector<16x8xf32> -> vector<16x32xf32>
    %62 = arith.truncf %61 : vector<16x32xf32> to vector<16x32xbf16>
    %c0_10 = arith.constant 0 : index
    %c0_11 = arith.constant 0 : index
    %63 = vector.load %arg2[%c0_10, %c0_11] : memref<32x32xbf16, #tpu.memory_space<vmem>>, vector<32x32xbf16>
    %cst_12 = arith.constant dense<0.000000e+00> : vector<16x32xf32>
    %64 = tpu.matmul %62, %63, %cst_12 {dimension_numbers = #tpu.dot_dimension_numbers<[1], [0], [0], [1], [0, 0, 1, 1], [], []>} : vector<16x32xbf16>, vector<32x32xbf16>, vector<16x32xf32> -> vector<16x32xf32>
    %65 = vector.extract_strided_slice %1 {offsets = [1, 0], sizes = [1, 32], strides = [1, 1]} : vector<8x128xf32> to vector<1x32xf32>
    %66 = vector.broadcast %65 : vector<1x32xf32> to vector<16x32xf32>
    %67 = arith.addf %64, %66 : vector<16x32xf32>
    %68 = arith.addf %0, %67 : vector<16x32xf32>
    %69 = vector.extract_strided_slice %1 {offsets = [4, 0], sizes = [1, 32], strides = [1, 1]} : vector<8x128xf32> to vector<1x32xf32>
    %70 = vector.extract_strided_slice %1 {offsets = [5, 0], sizes = [1, 32], strides = [1, 1]} : vector<8x128xf32> to vector<1x32xf32>
    %cst_13 = arith.constant dense<0.000000e+00> : vector<16xf32>
    %71 = vector.multi_reduction <add>, %68, %cst_13 [1] : vector<16x32xf32> to vector<16xf32>
    %72 = vector.shape_cast %71 : vector<16xf32> to vector<16x1xf32>
    %cst_14 = arith.constant 3.200000e+01 : f32
    %73 = vector.broadcast %cst_14 : f32 to vector<16x1xf32>
    %74 = arith.divf %72, %73 : vector<16x1xf32>
    %75 = vector.broadcast %74 : vector<16x1xf32> to vector<16x32xf32>
    %76 = arith.subf %68, %75 : vector<16x32xf32>
    %77 = arith.mulf %76, %76 : vector<16x32xf32>
    %cst_15 = arith.constant dense<0.000000e+00> : vector<16xf32>
    %78 = vector.multi_reduction <add>, %77, %cst_15 [1] : vector<16x32xf32> to vector<16xf32>
    %79 = vector.shape_cast %78 : vector<16xf32> to vector<16x1xf32>
    %cst_16 = arith.constant 3.200000e+01 : f32
    %80 = vector.broadcast %cst_16 : f32 to vector<16x1xf32>
    %81 = arith.divf %79, %80 : vector<16x1xf32>
    %82 = vector.broadcast %74 : vector<16x1xf32> to vector<16x32xf32>
    %83 = arith.subf %68, %82 : vector<16x32xf32>
    %cst_17 = arith.constant 9.99999974E-6 : f32
    %84 = vector.broadcast %cst_17 : f32 to vector<16x1xf32>
    %85 = arith.addf %81, %84 : vector<16x1xf32>
    %86 = math.rsqrt %85 : vector<16x1xf32>
    %87 = vector.broadcast %86 : vector<16x1xf32> to vector<16x32xf32>
    %88 = arith.mulf %83, %87 : vector<16x32xf32>
    %89 = vector.broadcast %69 : vector<1x32xf32> to vector<16x32xf32>
    %90 = arith.mulf %88, %89 : vector<16x32xf32>
    %91 = vector.broadcast %70 : vector<1x32xf32> to vector<16x32xf32>
    %92 = arith.addf %90, %91 : vector<16x32xf32>
    %93 = arith.truncf %92 : vector<16x32xf32> to vector<16x32xbf16>
    %c0_18 = arith.constant 0 : index
    %c0_19 = arith.constant 0 : index
    %94 = vector.load %arg3[%c0_18, %c0_19] : memref<32x64xbf16, #tpu.memory_space<vmem>>, vector<32x64xbf16>
    %cst_20 = arith.constant dense<0.000000e+00> : vector<16x64xf32>
    %95 = tpu.matmul %93, %94, %cst_20 {dimension_numbers = #tpu.dot_dimension_numbers<[1], [0], [0], [1], [0, 0, 1, 1], [], []>} : vector<16x32xbf16>, vector<32x64xbf16>, vector<16x64xf32> -> vector<16x64xf32>
    %96 = vector.extract_strided_slice %1 {offsets = [2, 0], sizes = [1, 64], strides = [1, 1]} : vector<8x128xf32> to vector<1x64xf32>
    %97 = vector.broadcast %96 : vector<1x64xf32> to vector<16x64xf32>
    %98 = arith.addf %95, %97 : vector<16x64xf32>
    %cst_21 = arith.constant 0.000000e+00 : f32
    %99 = vector.broadcast %cst_21 : f32 to vector<16x64xf32>
    %100 = arith.maximumf %98, %99 : vector<16x64xf32>
    %101 = arith.truncf %100 : vector<16x64xf32> to vector<16x64xbf16>
    %c0_22 = arith.constant 0 : index
    %c0_23 = arith.constant 0 : index
    %102 = vector.load %arg4[%c0_22, %c0_23] : memref<64x32xbf16, #tpu.memory_space<vmem>>, vector<64x32xbf16>
    %cst_24 = arith.constant dense<0.000000e+00> : vector<16x32xf32>
    %103 = tpu.matmul %101, %102, %cst_24 {dimension_numbers = #tpu.dot_dimension_numbers<[1], [0], [0], [1], [0, 0, 1, 1], [], []>} : vector<16x64xbf16>, vector<64x32xbf16>, vector<16x32xf32> -> vector<16x32xf32>
    %104 = vector.extract_strided_slice %1 {offsets = [3, 0], sizes = [1, 32], strides = [1, 1]} : vector<8x128xf32> to vector<1x32xf32>
    %105 = vector.broadcast %104 : vector<1x32xf32> to vector<16x32xf32>
    %106 = arith.addf %103, %105 : vector<16x32xf32>
    %107 = arith.addf %92, %106 : vector<16x32xf32>
    %108 = vector.extract_strided_slice %1 {offsets = [6, 0], sizes = [1, 32], strides = [1, 1]} : vector<8x128xf32> to vector<1x32xf32>
    %109 = vector.extract_strided_slice %1 {offsets = [7, 0], sizes = [1, 32], strides = [1, 1]} : vector<8x128xf32> to vector<1x32xf32>
    %cst_25 = arith.constant dense<0.000000e+00> : vector<16xf32>
    %110 = vector.multi_reduction <add>, %107, %cst_25 [1] : vector<16x32xf32> to vector<16xf32>
    %111 = vector.shape_cast %110 : vector<16xf32> to vector<16x1xf32>
    %cst_26 = arith.constant 3.200000e+01 : f32
    %112 = vector.broadcast %cst_26 : f32 to vector<16x1xf32>
    %113 = arith.divf %111, %112 : vector<16x1xf32>
    %114 = vector.broadcast %113 : vector<16x1xf32> to vector<16x32xf32>
    %115 = arith.subf %107, %114 : vector<16x32xf32>
    %116 = arith.mulf %115, %115 : vector<16x32xf32>
    %cst_27 = arith.constant dense<0.000000e+00> : vector<16xf32>
    %117 = vector.multi_reduction <add>, %116, %cst_27 [1] : vector<16x32xf32> to vector<16xf32>
    %118 = vector.shape_cast %117 : vector<16xf32> to vector<16x1xf32>
    %cst_28 = arith.constant 3.200000e+01 : f32
    %119 = vector.broadcast %cst_28 : f32 to vector<16x1xf32>
    %120 = arith.divf %118, %119 : vector<16x1xf32>
    %121 = vector.broadcast %113 : vector<16x1xf32> to vector<16x32xf32>
    %122 = arith.subf %107, %121 : vector<16x32xf32>
    %cst_29 = arith.constant 9.99999974E-6 : f32
    %123 = vector.broadcast %cst_29 : f32 to vector<16x1xf32>
    %124 = arith.addf %120, %123 : vector<16x1xf32>
    %125 = math.rsqrt %124 : vector<16x1xf32>
    %126 = vector.broadcast %125 : vector<16x1xf32> to vector<16x32xf32>
    %127 = arith.mulf %122, %126 : vector<16x32xf32>
    %128 = vector.broadcast %108 : vector<1x32xf32> to vector<16x32xf32>
    %129 = arith.mulf %127, %128 : vector<16x32xf32>
    %130 = vector.broadcast %109 : vector<1x32xf32> to vector<16x32xf32>
    %131 = arith.addf %129, %130 : vector<16x32xf32>
    %c0_30 = arith.constant 0 : index
    %c0_31 = arith.constant 0 : index
    %132 = vector.load %arg6[%c0_30, %c0_31] : memref<16x32xf32, #tpu.memory_space<vmem>>, vector<16x32xf32>
    tpu.vector_store %arg6[%c0_30, %c0_31], %131 {strides = array<i32>} : memref<16x32xf32, #tpu.memory_space<vmem>>, vector<16x32xf32>,
    return
  }
}

</mosaic_0001>

<llo_original>
// kernel: transformer_encoder_layer.1
$region0: #{transformer_encoder_layer.1}
  #allocation0 [shape = 'u32[]', space=smem, size = 0x4, offset = 0x4, fixed_abs, tag = 'smem constant byte address 0x4 - core index']
  #allocation1 [shape = 'u32[72,128]{1,0:T(1,128)}', space=vmem, size = 0x9000, scoped, tag = 'internal scratch']
  %s0 = inlined_call_operand.vmem [shape: f32[16,32], index: 0, kind: input, shape index: {}]
  %s1 = inlined_call_operand.vmem [shape: bf16[32,96], index: 1, kind: input, shape index: {}]
  %s2 = inlined_call_operand.vmem [shape: bf16[32,32], index: 2, kind: input, shape index: {}]
  %s3 = inlined_call_operand.hbm [shape: bf16[32,64], index: 3, kind: input, shape index: {}]
  %s4 = inlined_call_operand.vmem [shape: bf16[64,32], index: 4, kind: input, shape index: {}]
  %s5 = inlined_call_operand.hbm [shape: f32[8,128], index: 5, kind: input, shape index: {}]
  %s6 = inlined_call_operand.hbm [shape: f32[16,32], index: 6, kind: output, shape index: {}]
  %s7 = sld [smem:[#allocation0]]
  $region42: #{transformer_encoder_layer.1} parent=0
    _
  %s9 = ssub.s32 1, %s7
  %s10 = scalar_select 0, %s9, %s7
  $region1: #{transformer_encoder_layer.1} parent=0
    #allocation2 [shape = 'u8[8192]{0}', space=vmem, size = 0x2000, scoped, tag = 'input window, operand 3, single buffered']
    #allocation3 [shape = 's32[1]{0}', space=sflag, size = 0x4, scoped, tag = 'scoped memory for transformer_encoder_layer.1']
    #allocation4 [shape = 's32[1]{0}', space=sflag, size = 0x4, scoped, tag = 'scoped memory for transformer_encoder_layer.1']
    #allocation5 [shape = 'u8[4096]{0}', space=vmem, size = 0x1000, scoped, tag = 'input window, operand 5, single buffered']
    #allocation6 [shape = 's32[1]{0}', space=sflag, size = 0x4, scoped, tag = 'scoped memory for transformer_encoder_layer.1']
    #allocation7 [shape = 'u8[8192]{0}', space=vmem, size = 0x2000, scoped, tag = 'output window, operand 0, single buffered']
    %11 = vsyncpa [#allocation3], 0
    %12 = vsyncpa [#allocation6], 0
    %13 = vsyncpa [#allocation4], 0
    // Predicated region
    $region2: #{transformer_encoder_layer.1} parent=1 // pred_check
      _
    $region3: #{transformer_encoder_layer.1} parent=1 // pred_check_branch
      %15 = sbr.rel (0) target = $region5
    $region4: #{transformer_encoder_layer.1} parent=1 // pred_region
      _
    $region5: #{transformer_encoder_layer.1} parent=1 // pred_fallthru
      _
    // Predicated region
    $region6: #{transformer_encoder_layer.1} parent=1 // pred_check
      _
    $region7: #{transformer_encoder_layer.1} parent=1 // pred_check_branch
      %17 = sbr.rel (0) target = $region9
    $region8: #{transformer_encoder_layer.1} parent=1 // pred_region
      _
    $region9: #{transformer_encoder_layer.1} parent=1 // pred_fallthru
      _
    // Predicated region
    $region10: #{transformer_encoder_layer.1} parent=1 // pred_check
      _
    $region11: #{transformer_encoder_layer.1} parent=1 // pred_check_branch
      %19 = sbr.rel (0) target = $region13
    $region12: #{transformer_encoder_layer.1} parent=1 // pred_region
      _
    $region13: #{transformer_encoder_layer.1} parent=1 // pred_fallthru
      _
    // Predicated region
    $region14: #{transformer_encoder_layer.1} parent=1 // pred_check
      _
    $region15: #{transformer_encoder_layer.1} parent=1 // pred_check_branch
      %21 = sbr.rel (0) target = $region17
    $region16: #{transformer_encoder_layer.1} parent=1 // pred_region
      %23 = vsyncadd [#allocation3], 0
      %s24 = sshll.u32 %s3, 4
      %s25 = int_to_ptr.hbm [resolvable:$true] %s24
      %s26 = sshll.u32 [#allocation2], 4
      %s27 = int_to_ptr.vmem [resolvable:$true] %s26
      %32 = dma.hbm_to_vmem [thread:$0]  %s25, 256, %s27, [#allocation3], 64, 64, 4
    $region17: #{transformer_encoder_layer.1} parent=1 // pred_fallthru
      _
    // Predicated region
    $region18: #{transformer_encoder_layer.1} parent=1 // pred_check
      _
    $region19: #{transformer_encoder_layer.1} parent=1 // pred_check_branch
      %34 = sbr.rel (0) target = $region21
    $region20: #{transformer_encoder_layer.1} parent=1 // pred_region
      _
    $region21: #{transformer_encoder_layer.1} parent=1 // pred_fallthru
      _
    // Predicated region
    $region22: #{transformer_encoder_layer.1} parent=1 // pred_check
      _
    $region23: #{transformer_encoder_layer.1} parent=1 // pred_check_branch
      %36 = sbr.rel (0) target = $region25
    $region24: #{transformer_encoder_layer.1} parent=1 // pred_region
      %38 = vsyncadd [#allocation6], 0
      %s40 = sshll.u32 %s5, 4
      %s41 = int_to_ptr.hbm [resolvable:$true] %s40
      %s42 = sshll.u32 [#allocation5], 4
      %s43 = int_to_ptr.vmem [resolvable:$true] %s42
      %45 = dma.hbm_to_vmem [thread:$0]  %s41, 128, %s43, [#allocation6]
    $region25: #{transformer_encoder_layer.1} parent=1 // pred_fallthru
      _
    // Predicated region
    $region26: #{transformer_encoder_layer.1} parent=1 // pred_check
      _
    $region27: #{transformer_encoder_layer.1} parent=1 // pred_check_branch
      %47 = sbr.rel (0) target = $region29
    $region28: #{transformer_encoder_layer.1} parent=1 // pred_region
      %49 = dma.done [#allocation3], 256
    $region29: #{transformer_encoder_layer.1} parent=1 // pred_fallthru
      _
    // Predicated region
    $region30: #{transformer_encoder_layer.1} parent=1 // pred_check
      _
    $region31: #{transformer_encoder_layer.1} parent=1 // pred_check_branch
      %51 = sbr.rel (0) target = $region33
    $region32: #{transformer_encoder_layer.1} parent=1 // pred_region
      %53 = dma.done [#allocation6], 128
    $region33: #{transformer_encoder_layer.1} parent=1 // pred_fallthru
      _
    %v55 = vld [vmem:[%s0] sm:$0xff]
    %v56 = vld [vmem:[%s0 + $0x8] sm:$0xff]
    %v57 = vld [vmem:[#allocation5] sm:$0xff]
    %v58 = vpack.c.bf16 %v56, %v55
    %v59 = vld [vmem:[%s1] sm:$0xf]
    %v60 = vld [vmem:[%s1 + $0x4] sm:$0xf]
    %v61 = vld [vmem:[%s1 + $0x8] sm:$0xf]
    %v62 = vld [vmem:[%s1 + $0xc] sm:$0xf]
    %v63 = vperm.slane %v57, 0
    %v68 = vunpack.c.l.b16 %v59
    %v69 = vunpack.c.l.b16 %v60
    %v70 = vunpack.c.l.b16 %v61
    %v71 = vunpack.c.l.b16 %v62
    %v72 = vpack.c.b16 %v69, %v68
    %v73 = vpack.c.b16 %v71, %v70
    %vm76 = vcmask 261120
    %v78 = vsel %vm76, %v58, 0
    %80 = vmatpush.bf16.msra.mxu0 0
    %81 = vmatpush.bf16.msra.mxu0 0
    %82 = vmatpush.bf16.msra.mxu0 0
    %83 = vmatpush.bf16.msra.mxu0 0
    %84 = vmatpush.bf16.msra.mxu0 0
    %85 = vmatpush.bf16.msra.mxu0 0
    %86 = vmatpush.bf16.msra.mxu0 %v73
    %87 = vmatpush.bf16.msra.mxu0 %v72
    %88 = vmatmul.bf16.gmra.mxu0 %v78
    %v89 = vpop.f32.mrf.mxu0
    %v90 = vadd.f32 %v63, %v89
    %v91 = vpop.f32.mrf.mxu0
    %v92 = vadd.f32 %v63, %v91
    %93 = vdwg.mxu0
    %96 = vrot.lane.b32.xlu0 %v90, 120
    %v97 = vpop.permute.xlu0 %96
    %98 = vrot.lane.b32.xlu0 %v92, 120
    %v99 = vpop.permute.xlu0 %98
    %102 = vrot.lane.b32.xlu0 %v90, 112
    %v103 = vpop.permute.xlu0 %102
    %104 = vrot.lane.b32.xlu0 %v92, 112
    %v105 = vpop.permute.xlu0 %104
    %108 = vrot.lane.b32.xlu0 %v90, 104
    %v109 = vpop.permute.xlu0 %108
    %110 = vrot.lane.b32.xlu0 %v92, 104
    %v111 = vpop.permute.xlu0 %110
    %v114 = vpack.c.bf16 %v90, %v90
    %v115 = vpack.c.bf16 %v92, %v92
    %v116 = vpack.c.bf16 %v97, %v97
    %v117 = vpack.c.bf16 %v99, %v99
    %v118 = vpack.c.bf16 %v103, %v103
    %v119 = vpack.c.bf16 %v105, %v105
    %v120 = vpack.c.bf16 %v109, %v109
    %v121 = vpack.c.bf16 %v111, %v111
    %v123 = vunpack.c.l.b16 %v114
    %v124 = vpack.c.b16 %v123, %v123
    %125 = vrot.lane.b32.xlu0 %v124, 96
    %v126 = vpop.permute.xlu0 %125
    %vm127 = vcmask 64512
    %v129 = vsel %vm127, %v114, 0
    %v132 = vsel %vm127, %v126, 0
    %134 = vmatpush.bf16.xpose.msra.mxu0 0
    %135 = vmatpush.bf16.xpose.msra.mxu0 0
    %136 = vmatpush.bf16.xpose.msra.mxu0 0
    %137 = vmatpush.bf16.xpose.msra.mxu0 0
    %138 = vmatpush.bf16.xpose.msra.mxu0 0
    %139 = vmatpush.bf16.xpose.msra.mxu0 0
    %140 = vmatpush.bf16.xpose.msra.mxu0 0
    %141 = vmatpush.bf16.xpose.msra.mxu0 %v132
    %142 = vmatmul.bf16.gmra.mxu0 %v129
    %v143 = vpop.f32.mrf.mxu0
    %v144 = vadd.f32 0.0, %v143
    %v145 = vpop.f32.mrf.mxu0
    %146 = vdwg.mxu0
    %v148 = vunpack.c.l.b16 %v115
    %v149 = vpack.c.b16 %v148, %v148
    %150 = vrot.lane.b32.xlu0 %v149, 96
    %v151 = vpop.permute.xlu0 %150
    %v153 = vsel %vm127, %v115, 0
    %v156 = vsel %vm127, %v151, 0
    %158 = vmatpush.bf16.xpose.msra.mxu0 0
    %159 = vmatpush.bf16.xpose.msra.mxu0 0
    %160 = vmatpush.bf16.xpose.msra.mxu0 0
    %161 = vmatpush.bf16.xpose.msra.mxu0 0
    %162 = vmatpush.bf16.xpose.msra.mxu0 0
    %163 = vmatpush.bf16.xpose.msra.mxu0 0
    %164 = vmatpush.bf16.xpose.msra.mxu0 0
    %165 = vmatpush.bf16.xpose.msra.mxu0 %v156
    %166 = vmatmul.bf16.gmra.mxu0 %v153
    %v167 = vpop.f32.mrf.mxu0
    %v168 = vadd.f32 0.0, %v167
    %v169 = vpop.f32.mrf.mxu0
    %170 = vdwg.mxu0
    %v172 = vunpack.c.l.b16 %v116
    %v173 = vpack.c.b16 %v172, %v172
    %174 = vrot.lane.b32.xlu0 %v173, 96
    %v175 = vpop.permute.xlu0 %174
    %v177 = vsel %vm127, %v116, 0
    %v180 = vsel %vm127, %v175, 0
    %182 = vmatpush.bf16.xpose.msra.mxu0 0
    %183 = vmatpush.bf16.xpose.msra.mxu0 0
    %184 = vmatpush.bf16.xpose.msra.mxu0 0
    %185 = vmatpush.bf16.xpose.msra.mxu0 0
    %186 = vmatpush.bf16.xpose.msra.mxu0 0
    %187 = vmatpush.bf16.xpose.msra.mxu0 0
    %188 = vmatpush.bf16.xpose.msra.mxu0 0
    %189 = vmatpush.bf16.xpose.msra.mxu0 %v180
    %190 = vmatmul.bf16.gmra.mxu0 %v177
    %v191 = vpop.f32.mrf.mxu0
    %v192 = vadd.f32 0.0, %v191
    %v193 = vpop.f32.mrf.mxu0
    %194 = vdwg.mxu0
    %v196 = vunpack.c.l.b16 %v117
    %v197 = vpack.c.b16 %v196, %v196
    %198 = vrot.lane.b32.xlu0 %v197, 96
    %v199 = vpop.permute.xlu0 %198
    %v201 = vsel %vm127, %v117, 0
    %v204 = vsel %vm127, %v199, 0
    %206 = vmatpush.bf16.xpose.msra.mxu0 0
    %207 = vmatpush.bf16.xpose.msra.mxu0 0
    %208 = vmatpush.bf16.xpose.msra.mxu0 0
    %209 = vmatpush.bf16.xpose.msra.mxu0 0
    %210 = vmatpush.bf16.xpose.msra.mxu0 0
    %211 = vmatpush.bf16.xpose.msra.mxu0 0
    %212 = vmatpush.bf16.xpose.msra.mxu0 0
    %213 = vmatpush.bf16.xpose.msra.mxu0 %v204
    %214 = vmatmul.bf16.gmra.mxu0 %v201
    %v215 = vpop.f32.mrf.mxu0
    %v216 = vadd.f32 0.0, %v215
    %v217 = vpop.f32.mrf.mxu0
    %218 = vdwg.mxu0
    %v220 = vunpack.c.l.b16 %v118
    %v221 = vpack.c.b16 %v220, %v220
    %222 = vrot.lane.b32.xlu0 %v221, 96
    %v223 = vpop.permute.xlu0 %222
    %v225 = vsel %vm127, %v118, 0
    %v228 = vsel %vm127, %v223, 0
    %230 = vmatpush.bf16.xpose.msra.mxu0 0
    %231 = vmatpush.bf16.xpose.msra.mxu0 0
    %232 = vmatpush.bf16.xpose.msra.mxu0 0
    %233 = vmatpush.bf16.xpose.msra.mxu0 0
    %234 = vmatpush.bf16.xpose.msra.mxu0 0
    %235 = vmatpush.bf16.xpose.msra.mxu0 0
    %236 = vmatpush.bf16.xpose.msra.mxu0 0
    %237 = vmatpush.bf16.xpose.msra.mxu0 %v228
    %238 = vmatmul.bf16.gmra.mxu0 %v225
    %v239 = vpop.f32.mrf.mxu0
    %v240 = vadd.f32 0.0, %v239
    %v241 = vpop.f32.mrf.mxu0
    %242 = vdwg.mxu0
    %v244 = vunpack.c.l.b16 %v119
    %v245 = vpack.c.b16 %v244, %v244
    %246 = vrot.lane.b32.xlu0 %v245, 96
    %v247 = vpop.permute.xlu0 %246
    %v249 = vsel %vm127, %v119, 0
    %v252 = vsel %vm127, %v247, 0
    %254 = vmatpush.bf16.xpose.msra.mxu0 0
    %255 = vmatpush.bf16.xpose.msra.mxu0 0
    %256 = vmatpush.bf16.xpose.msra.mxu0 0
    %257 = vmatpush.bf16.xpose.msra.mxu0 0
    %258 = vmatpush.bf16.xpose.msra.mxu0 0
    %259 = vmatpush.bf16.xpose.msra.mxu0 0
    %260 = vmatpush.bf16.xpose.msra.mxu0 0
    %261 = vmatpush.bf16.xpose.msra.mxu0 %v252
    %262 = vmatmul.bf16.gmra.mxu0 %v249
    %v263 = vpop.f32.mrf.mxu0
    %v264 = vadd.f32 0.0, %v263
    %v265 = vpop.f32.mrf.mxu0
    %266 = vdwg.mxu0
    %v268 = vunpack.c.l.b16 %v120
    %v269 = vpack.c.b16 %v268, %v268
    %270 = vrot.lane.b32.xlu0 %v269, 96
    %v271 = vpop.permute.xlu0 %270
    %v273 = vsel %vm127, %v120, 0
    %v276 = vsel %vm127, %v271, 0
    %278 = vmatpush.bf16.xpose.msra.mxu0 0
    %279 = vmatpush.bf16.xpose.msra.mxu0 0
    %280 = vmatpush.bf16.xpose.msra.mxu0 0
    %281 = vmatpush.bf16.xpose.msra.mxu0 0
    %282 = vmatpush.bf16.xpose.msra.mxu0 0
    %283 = vmatpush.bf16.xpose.msra.mxu0 0
    %284 = vmatpush.bf16.xpose.msra.mxu0 0
    %285 = vmatpush.bf16.xpose.msra.mxu0 %v276
    %286 = vmatmul.bf16.gmra.mxu0 %v273
    %v287 = vpop.f32.mrf.mxu0
    %v288 = vadd.f32 0.0, %v287
    %v289 = vpop.f32.mrf.mxu0
    %290 = vdwg.mxu0
    %v292 = vunpack.c.l.b16 %v121
    %v293 = vpack.c.b16 %v292, %v292
    %294 = vrot.lane.b32.xlu0 %v293, 96
    %v295 = vpop.permute.xlu0 %294
    %v297 = vsel %vm127, %v121, 0
    %v300 = vsel %vm127, %v295, 0
    %302 = vmatpush.bf16.xpose.msra.mxu0 0
    %303 = vmatpush.bf16.xpose.msra.mxu0 0
    %304 = vmatpush.bf16.xpose.msra.mxu0 0
    %305 = vmatpush.bf16.xpose.msra.mxu0 0
    %306 = vmatpush.bf16.xpose.msra.mxu0 0
    %307 = vmatpush.bf16.xpose.msra.mxu0 0
    %308 = vmatpush.bf16.xpose.msra.mxu0 0
    %309 = vmatpush.bf16.xpose.msra.mxu0 %v300
    %310 = vmatmul.bf16.gmra.mxu0 %v297
    %v311 = vpop.f32.mrf.mxu0
    %v312 = vadd.f32 0.0, %v311
    %v313 = vpop.f32.mrf.mxu0
    %314 = vdwg.mxu0
    %v315 = vmul.f32 %v144, 0.35355338
    %v316 = vmul.f32 %v168, 0.35355338
    %v317 = vmul.f32 %v192, 0.35355338
    %v318 = vmul.f32 %v216, 0.35355338
    %v319 = vmul.f32 %v240, 0.35355338
    %v320 = vmul.f32 %v264, 0.35355338
    %v321 = vmul.f32 %v288, 0.35355338
    %v322 = vmul.f32 %v312, 0.35355338
    %v323 = vsel %vm127, %v315, -inf
    %324 = vmax.xlane.f32.xlu0 %v323
    %v325 = vpop.xlane.xlu0 %324
    %v326 = vsel %vm127, %v316, -inf
    %327 = vmax.xlane.f32.xlu0 %v326
    %v328 = vpop.xlane.xlu0 %327
    %v329 = vsel %vm127, %v317, -inf
    %330 = vmax.xlane.f32.xlu0 %v329
    %v331 = vpop.xlane.xlu0 %330
    %v332 = vsel %vm127, %v318, -inf
    %333 = vmax.xlane.f32.xlu0 %v332
    %v334 = vpop.xlane.xlu0 %333
    %v335 = vsel %vm127, %v319, -inf
    %336 = vmax.xlane.f32.xlu0 %v335
    %v337 = vpop.xlane.xlu0 %336
    %v338 = vsel %vm127, %v320, -inf
    %339 = vmax.xlane.f32.xlu0 %v338
    %v340 = vpop.xlane.xlu0 %339
    %v341 = vsel %vm127, %v321, -inf
    %342 = vmax.xlane.f32.xlu0 %v341
    %v343 = vpop.xlane.xlu0 %342
    %v344 = vsel %vm127, %v322, -inf
    %345 = vmax.xlane.f32.xlu0 %v344
    %v346 = vpop.xlane.xlu0 %345
    %v347 = vsub.f32 %v315, %v325
    %v348 = vsub.f32 %v316, %v328
    %v349 = vsub.f32 %v317, %v331
    %v350 = vsub.f32 %v318, %v334
    %v351 = vsub.f32 %v319, %v337
    %v352 = vsub.f32 %v320, %v340
    %v353 = vsub.f32 %v321, %v343
    %v354 = vsub.f32 %v322, %v346
    %v355 = vmul.f32 %v347, 1.442695
    %v356 = vpow.pop %v355
    %v357 = vmul.f32 %v348, 1.442695
    %v358 = vpow.pop %v357
    %v359 = vmul.f32 %v349, 1.442695
    %v360 = vpow.pop %v359
    %v361 = vmul.f32 %v350, 1.442695
    %v362 = vpow.pop %v361
    %v363 = vmul.f32 %v351, 1.442695
    %v364 = vpow.pop %v363
    %v365 = vmul.f32 %v352, 1.442695
    %v366 = vpow.pop %v365
    %v367 = vmul.f32 %v353, 1.442695
    %v368 = vpow.pop %v367
    %v369 = vmul.f32 %v354, 1.442695
    %v370 = vpow.pop %v369
    %v371 = vsel %vm127, %v356, 0.0
    %372 = vadd.xlane.f32.xlu0 %v371
    %v373 = vpop.xlane.xlu0 %372
    %v374 = vsel %vm127, %v358, 0.0
    %375 = vadd.xlane.f32.xlu0 %v374
    %v376 = vpop.xlane.xlu0 %375
    %v377 = vsel %vm127, %v360, 0.0
    %378 = vadd.xlane.f32.xlu0 %v377
    %v379 = vpop.xlane.xlu0 %378
    %v380 = vsel %vm127, %v362, 0.0
    %381 = vadd.xlane.f32.xlu0 %v380
    %v382 = vpop.xlane.xlu0 %381
    %v383 = vsel %vm127, %v364, 0.0
    %384 = vadd.xlane.f32.xlu0 %v383
    %v385 = vpop.xlane.xlu0 %384
    %v386 = vsel %vm127, %v366, 0.0
    %387 = vadd.xlane.f32.xlu0 %v386
    %v388 = vpop.xlane.xlu0 %387
    %v389 = vsel %vm127, %v368, 0.0
    %390 = vadd.xlane.f32.xlu0 %v389
    %v391 = vpop.xlane.xlu0 %390
    %v392 = vsel %vm127, %v370, 0.0
    %393 = vadd.xlane.f32.xlu0 %v392
    %v394 = vpop.xlane.xlu0 %393
    %v395 = vrcp.pop %v373
    %v396 = vrcp.pop %v376
    %v397 = vrcp.pop %v379
    %v398 = vrcp.pop %v382
    %v399 = vrcp.pop %v385
    %v400 = vrcp.pop %v388
    %v401 = vrcp.pop %v391
    %v402 = vrcp.pop %v394
    %v403 = vmul.f32 %v356, %v395
    %v404 = vmul.f32 %v358, %v396
    %v405 = vmul.f32 %v360, %v397
    %v406 = vmul.f32 %v362, %v398
    %v407 = vmul.f32 %v364, %v399
    %v408 = vmul.f32 %v366, %v400
    %v409 = vmul.f32 %v368, %v401
    %v410 = vmul.f32 %v370, %v402
    %v411 = vpack.c.bf16 %v403, %v403
    %v412 = vpack.c.bf16 %v404, %v404
    %v413 = vpack.c.bf16 %v405, %v405
    %v414 = vpack.c.bf16 %v406, %v406
    %v415 = vpack.c.bf16 %v407, %v407
    %v416 = vpack.c.bf16 %v408, %v408
    %v417 = vpack.c.bf16 %v409, %v409
    %v418 = vpack.c.bf16 %v410, %v410
    %419 = vrot.lane.b32.xlu0 %v124, 64
    %v420 = vpop.permute.xlu0 %419
    %v422 = vsel %vm127, %v411, 0
    %vm424 = vcmask 1043456
    %v426 = vsel %vm424, %v420, 0
    %428 = vmatpush.bf16.msra.mxu0 0
    %429 = vmatpush.bf16.msra.mxu0 0
    %430 = vmatpush.bf16.msra.mxu0 0
    %431 = vmatpush.bf16.msra.mxu0 0
    %432 = vmatpush.bf16.msra.mxu0 0
    %433 = vmatpush.bf16.msra.mxu0 0
    %434 = vmatpush.bf16.msra.mxu0 0
    %435 = vmatpush.bf16.msra.mxu0 %v426
    %436 = vmatmul.bf16.gmra.mxu0 %v422
    %v437 = vpop.f32.mrf.mxu0
    %v438 = vadd.f32 0.0, %v437
    %v439 = vpop.f32.mrf.mxu0
    %440 = vdwg.mxu0
    %441 = vrot.lane.b32.xlu0 %v149, 64
    %v442 = vpop.permute.xlu0 %441
    %v444 = vsel %vm127, %v412, 0
    %v447 = vsel %vm424, %v442, 0
    %449 = vmatpush.bf16.msra.mxu0 0
    %450 = vmatpush.bf16.msra.mxu0 0
    %451 = vmatpush.bf16.msra.mxu0 0
    %452 = vmatpush.bf16.msra.mxu0 0
    %453 = vmatpush.bf16.msra.mxu0 0
    %454 = vmatpush.bf16.msra.mxu0 0
    %455 = vmatpush.bf16.msra.mxu0 0
    %456 = vmatpush.bf16.msra.mxu0 %v447
    %457 = vmatmul.bf16.gmra.mxu0 %v444
    %v458 = vpop.f32.mrf.mxu0
    %v459 = vadd.f32 0.0, %v458
    %v460 = vpop.f32.mrf.mxu0
    %461 = vdwg.mxu0
    %462 = vrot.lane.b32.xlu0 %v173, 64
    %v463 = vpop.permute.xlu0 %462
    %v465 = vsel %vm127, %v413, 0
    %v468 = vsel %vm424, %v463, 0
    %470 = vmatpush.bf16.msra.mxu0 0
    %471 = vmatpush.bf16.msra.mxu0 0
    %472 = vmatpush.bf16.msra.mxu0 0
    %473 = vmatpush.bf16.msra.mxu0 0
    %474 = vmatpush.bf16.msra.mxu0 0
    %475 = vmatpush.bf16.msra.mxu0 0
    %476 = vmatpush.bf16.msra.mxu0 0
    %477 = vmatpush.bf16.msra.mxu0 %v468
    %478 = vmatmul.bf16.gmra.mxu0 %v465
    %v479 = vpop.f32.mrf.mxu0
    %v480 = vadd.f32 0.0, %v479
    %v481 = vpop.f32.mrf.mxu0
    %482 = vdwg.mxu0
    %483 = vrot.lane.b32.xlu0 %v197, 64
    %v484 = vpop.permute.xlu0 %483
    %v486 = vsel %vm127, %v414, 0
    %v489 = vsel %vm424, %v484, 0
    %491 = vmatpush.bf16.msra.mxu0 0
    %492 = vmatpush.bf16.msra.mxu0 0
    %493 = vmatpush.bf16.msra.mxu0 0
    %494 = vmatpush.bf16.msra.mxu0 0
    %495 = vmatpush.bf16.msra.mxu0 0
    %496 = vmatpush.bf16.msra.mxu0 0
    %497 = vmatpush.bf16.msra.mxu0 0
    %498 = vmatpush.bf16.msra.mxu0 %v489
    %499 = vmatmul.bf16.gmra.mxu0 %v486
    %v500 = vpop.f32.mrf.mxu0
    %v501 = vadd.f32 0.0, %v500
    %v502 = vpop.f32.mrf.mxu0
    %503 = vdwg.mxu0
    %504 = vrot.lane.b32.xlu0 %v221, 64
    %v505 = vpop.permute.xlu0 %504
    %v507 = vsel %vm127, %v415, 0
    %v510 = vsel %vm424, %v505, 0
    %512 = vmatpush.bf16.msra.mxu0 0
    %513 = vmatpush.bf16.msra.mxu0 0
    %514 = vmatpush.bf16.msra.mxu0 0
    %515 = vmatpush.bf16.msra.mxu0 0
    %516 = vmatpush.bf16.msra.mxu0 0
    %517 = vmatpush.bf16.msra.mxu0 0
    %518 = vmatpush.bf16.msra.mxu0 0
    %519 = vmatpush.bf16.msra.mxu0 %v510
    %520 = vmatmul.bf16.gmra.mxu0 %v507
    %v521 = vpop.f32.mrf.mxu0
    %v522 = vadd.f32 0.0, %v521
    %v523 = vpop.f32.mrf.mxu0
    %524 = vdwg.mxu0
    %525 = vrot.lane.b32.xlu0 %v245, 64
    %v526 = vpop.permute.xlu0 %525
    %v528 = vsel %vm127, %v416, 0
    %v531 = vsel %vm424, %v526, 0
    %533 = vmatpush.bf16.msra.mxu0 0
    %534 = vmatpush.bf16.msra.mxu0 0
    %535 = vmatpush.bf16.msra.mxu0 0
    %536 = vmatpush.bf16.msra.mxu0 0
    %537 = vmatpush.bf16.msra.mxu0 0
    %538 = vmatpush.bf16.msra.mxu0 0
    %539 = vmatpush.bf16.msra.mxu0 0
    %540 = vmatpush.bf16.msra.mxu0 %v531
    %541 = vmatmul.bf16.gmra.mxu0 %v528
    %v542 = vpop.f32.mrf.mxu0
    %v543 = vadd.f32 0.0, %v542
    %v544 = vpop.f32.mrf.mxu0
    %545 = vdwg.mxu0
    %546 = vrot.lane.b32.xlu0 %v269, 64
    %v547 = vpop.permute.xlu0 %546
    %v549 = vsel %vm127, %v417, 0
    %v552 = vsel %vm424, %v547, 0
    %554 = vmatpush.bf16.msra.mxu0 0
    %555 = vmatpush.bf16.msra.mxu0 0
    %556 = vmatpush.bf16.msra.mxu0 0
    %557 = vmatpush.bf16.msra.mxu0 0
    %558 = vmatpush.bf16.msra.mxu0 0
    %559 = vmatpush.bf16.msra.mxu0 0
    %560 = vmatpush.bf16.msra.mxu0 0
    %561 = vmatpush.bf16.msra.mxu0 %v552
    %562 = vmatmul.bf16.gmra.mxu0 %v549
    %v563 = vpop.f32.mrf.mxu0
    %v564 = vadd.f32 0.0, %v563
    %v565 = vpop.f32.mrf.mxu0
    %566 = vdwg.mxu0
    %567 = vrot.lane.b32.xlu0 %v293, 64
    %v568 = vpop.permute.xlu0 %567
    %v570 = vsel %vm127, %v418, 0
    %v573 = vsel %vm424, %v568, 0
    %575 = vmatpush.bf16.msra.mxu0 0
    %576 = vmatpush.bf16.msra.mxu0 0
    %577 = vmatpush.bf16.msra.mxu0 0
    %578 = vmatpush.bf16.msra.mxu0 0
    %579 = vmatpush.bf16.msra.mxu0 0
    %580 = vmatpush.bf16.msra.mxu0 0
    %581 = vmatpush.bf16.msra.mxu0 0
    %582 = vmatpush.bf16.msra.mxu0 %v573
    %583 = vmatmul.bf16.gmra.mxu0 %v570
    %v584 = vpop.f32.mrf.mxu0
    %v585 = vadd.f32 0.0, %v584
    %v586 = vpop.f32.mrf.mxu0
    %587 = vdwg.mxu0
    %590 = vrot.lane.b32.xlu0 %v480, 8
    %v591 = vpop.permute.xlu0 %590
    %592 = vrot.lane.b32.xlu0 %v501, 8
    %v593 = vpop.permute.xlu0 %592
    %598 = vrot.lane.b32.xlu0 %v522, 16
    %v599 = vpop.permute.xlu0 %598
    %600 = vrot.lane.b32.xlu0 %v543, 16
    %v601 = vpop.permute.xlu0 %600
    %606 = vrot.lane.b32.xlu0 %v564, 24
    %v607 = vpop.permute.xlu0 %606
    %608 = vrot.lane.b32.xlu0 %v585, 24
    %v609 = vpop.permute.xlu0 %608
    %v612 = vsel %vm127, %v438, %v591
    %v613 = vsel %vm127, %v459, %v593
    %vm614 = vcmask 130048
    %v615 = vsel %vm614, %v612, %v599
    %v616 = vsel %vm614, %v613, %v601
    %vm617 = vcmask 195584
    %v618 = vsel %vm617, %v615, %v607
    %v619 = vsel %vm617, %v616, %v609
    %v620 = vpack.c.bf16 %v619, %v618
    %v621 = vld [vmem:[%s2] sm:$0xf]
    %v622 = vld [vmem:[%s2 + $0x4] sm:$0xf]
    %v623 = vld [vmem:[%s2 + $0x8] sm:$0xf]
    %v624 = vld [vmem:[%s2 + $0xc] sm:$0xf]
    %v625 = vperm.slane %v57, 1
    %v630 = vunpack.c.l.b16 %v621
    %v631 = vunpack.c.l.b16 %v622
    %v632 = vunpack.c.l.b16 %v623
    %v633 = vunpack.c.l.b16 %v624
    %v634 = vpack.c.b16 %v631, %v630
    %v635 = vpack.c.b16 %v633, %v632
    %v639 = vsel %vm76, %v620, 0
    %641 = vmatpush.bf16.msra.mxu0 0
    %642 = vmatpush.bf16.msra.mxu0 0
    %643 = vmatpush.bf16.msra.mxu0 0
    %644 = vmatpush.bf16.msra.mxu0 0
    %645 = vmatpush.bf16.msra.mxu0 0
    %646 = vmatpush.bf16.msra.mxu0 0
    %647 = vmatpush.bf16.msra.mxu0 %v635
    %648 = vmatpush.bf16.msra.mxu0 %v634
    %649 = vmatmul.bf16.gmra.mxu0 %v639
    %v650 = vpop.f32.mrf.mxu0
    %v651 = vadd.f32 %v625, %v650
    %v652 = vpop.f32.mrf.mxu0
    %v653 = vadd.f32 %v625, %v652
    %654 = vdwg.mxu0
    %v655 = vadd.f32 %v55, %v651
    %v656 = vadd.f32 %v56, %v653
    %v657 = vsel %vm76, %v655, 0.0
    %658 = vadd.xlane.f32.xlu0 %v657
    %v659 = vpop.xlane.xlu0 %658
    %v660 = vsel %vm76, %v656, 0.0
    %661 = vadd.xlane.f32.xlu0 %v660
    %v662 = vpop.xlane.xlu0 %661
    %v663 = vrcp.pop 32.0
    %v664 = vmul.f32 32.0, %v663
    %v665 = vsub.f32 1.0, %v664
    %v666 = vmul.f32 %v663, %v665
    %v667 = vadd.f32 %v663, %v666
    %vm668 = vweird.f32 %v663
    %v669 = vsel %vm668, %v663, %v667
    %v670 = vmul.f32 %v659, %v669
    %v671 = vmul.f32 %v662, %v669
    %v672 = vsub.f32 %v655, %v670
    %v673 = vsub.f32 %v656, %v671
    %v674 = vmul.f32 %v672, %v672
    %v675 = vmul.f32 %v673, %v673
    %v676 = vsel %vm76, %v674, 0.0
    %677 = vadd.xlane.f32.xlu0 %v676
    %v678 = vpop.xlane.xlu0 %677
    %v679 = vsel %vm76, %v675, 0.0
    %680 = vadd.xlane.f32.xlu0 %v679
    %v681 = vpop.xlane.xlu0 %680
    %v682 = vmul.f32 %v678, %v669
    %v683 = vmul.f32 %v681, %v669
    %v684 = vadd.f32 %v682, 1e-05
    %v685 = vadd.f32 %v683, 1e-05
    %v686 = vrsqrt.pop %v684
    %v687 = vmul.f32 %v686, %v684
    %v688 = vmul.f32 %v687, %v686
    %v689 = vmul.f32 0.5, %v688
    %v690 = vsub.f32 1.5, %v689
    %v691 = vmul.f32 %v686, %v690
    %vm692 = vweird.f32 %v684
    %vm693 = vweird.f32 %v686
    %vm694 = vmor %vm692, %vm693
    %v695 = vsel %vm694, %v686, %v691
    %v696 = vrsqrt.pop %v685
    %v697 = vmul.f32 %v696, %v685
    %v698 = vmul.f32 %v697, %v696
    %v699 = vmul.f32 0.5, %v698
    %v700 = vsub.f32 1.5, %v699
    %v701 = vmul.f32 %v696, %v700
    %vm702 = vweird.f32 %v685
    %vm703 = vweird.f32 %v696
    %vm704 = vmor %vm702, %vm703
    %v705 = vsel %vm704, %v696, %v701
    %v706 = vmul.f32 %v672, %v695
    %v707 = vmul.f32 %v673, %v705
    %v708 = vperm.slane %v57, 4
    %v709 = vmul.f32 %v706, %v708
    %v710 = vmul.f32 %v707, %v708
    %v711 = vperm.slane %v57, 5
    %v712 = vadd.f32 %v709, %v711
    %v713 = vadd.f32 %v710, %v711
    %v714 = vpack.c.bf16 %v713, %v712
    %v715 = vld [vmem:[#allocation2] sm:$0xf]
    %v716 = vld [vmem:[#allocation2 + $0x4] sm:$0xf]
    %v717 = vld [vmem:[#allocation2 + $0x8] sm:$0xf]
    %v718 = vld [vmem:[#allocation2 + $0xc] sm:$0xf]
    %v719 = vperm.slane %v57, 2
    %v724 = vunpack.c.l.b16 %v715
    %v725 = vunpack.c.l.b16 %v716
    %v726 = vunpack.c.l.b16 %v717
    %v727 = vunpack.c.l.b16 %v718
    %v728 = vpack.c.b16 %v725, %v724
    %v729 = vpack.c.b16 %v727, %v726
    %v733 = vsel %vm76, %v714, 0
    %735 = vmatpush.bf16.msra.mxu0 0
    %736 = vmatpush.bf16.msra.mxu0 0
    %737 = vmatpush.bf16.msra.mxu0 0
    %738 = vmatpush.bf16.msra.mxu0 0
    %739 = vmatpush.bf16.msra.mxu0 0
    %740 = vmatpush.bf16.msra.mxu0 0
    %741 = vmatpush.bf16.msra.mxu0 %v729
    %742 = vmatpush.bf16.msra.mxu0 %v728
    %743 = vmatmul.bf16.gmra.mxu0 %v733
    %v744 = vpop.f32.mrf.mxu0
    %v745 = vadd.f32 %v719, %v744
    %v746 = vpop.f32.mrf.mxu0
    %v747 = vadd.f32 %v719, %v746
    %748 = vdwg.mxu0
    %v749 = vmax.f32 %v745, 0.0
    %v750 = vmax.f32 %v747, 0.0
    %v751 = vpack.c.bf16 %v750, %v749
    %v752 = vld [vmem:[%s4] sm:$0xf]
    %v753 = vld [vmem:[%s4 + $0x4] sm:$0xf]
    %v754 = vld [vmem:[%s4 + $0x8] sm:$0xf]
    %v755 = vld [vmem:[%s4 + $0xc] sm:$0xf]
    %v756 = vld [vmem:[%s4 + $0x10] sm:$0xf]
    %v757 = vld [vmem:[%s4 + $0x14] sm:$0xf]
    %v758 = vld [vmem:[%s4 + $0x18] sm:$0xf]
    %v759 = vld [vmem:[%s4 + $0x1c] sm:$0xf]
    %v760 = vperm.slane %v57, 3
    %v769 = vunpack.c.l.b16 %v752
    %v770 = vunpack.c.l.b16 %v753
    %v771 = vunpack.c.l.b16 %v754
    %v772 = vunpack.c.l.b16 %v755
    %v773 = vunpack.c.l.b16 %v756
    %v774 = vunpack.c.l.b16 %v757
    %v775 = vunpack.c.l.b16 %v758
    %v776 = vunpack.c.l.b16 %v759
    %v777 = vpack.c.b16 %v770, %v769
    %v778 = vpack.c.b16 %v772, %v771
    %v779 = vpack.c.b16 %v774, %v773
    %v780 = vpack.c.b16 %v776, %v775
    %vm785 = vcmask 523264
    %v787 = vsel %vm785, %v751, 0
    %789 = vmatpush.bf16.msra.mxu0 0
    %790 = vmatpush.bf16.msra.mxu0 0
    %791 = vmatpush.bf16.msra.mxu0 0
    %792 = vmatpush.bf16.msra.mxu0 0
    %793 = vmatpush.bf16.msra.mxu0 %v780
    %794 = vmatpush.bf16.msra.mxu0 %v779
    %795 = vmatpush.bf16.msra.mxu0 %v778
    %796 = vmatpush.bf16.msra.mxu0 %v777
    %797 = vmatmul.bf16.gmra.mxu0 %v787
    %v798 = vpop.f32.mrf.mxu0
    %v799 = vadd.f32 %v760, %v798
    %v800 = vpop.f32.mrf.mxu0
    %v801 = vadd.f32 %v760, %v800
    %802 = vdwg.mxu0
    %v803 = vadd.f32 %v712, %v799
    %v804 = vadd.f32 %v713, %v801
    %v805 = vsel %vm76, %v803, 0.0
    %806 = vadd.xlane.f32.xlu0 %v805
    %v807 = vpop.xlane.xlu0 %806
    %v808 = vsel %vm76, %v804, 0.0
    %809 = vadd.xlane.f32.xlu0 %v808
    %v810 = vpop.xlane.xlu0 %809
    %v811 = vmul.f32 %v807, %v669
    %v812 = vmul.f32 %v810, %v669
    %v813 = vsub.f32 %v803, %v811
    %v814 = vsub.f32 %v804, %v812
    %v815 = vmul.f32 %v813, %v813
    %v816 = vmul.f32 %v814, %v814
    %v817 = vsel %vm76, %v815, 0.0
    %818 = vadd.xlane.f32.xlu0 %v817
    %v819 = vpop.xlane.xlu0 %818
    %v820 = vsel %vm76, %v816, 0.0
    %821 = vadd.xlane.f32.xlu0 %v820
    %v822 = vpop.xlane.xlu0 %821
    %v823 = vmul.f32 %v819, %v669
    %v824 = vmul.f32 %v822, %v669
    %v825 = vadd.f32 %v823, 1e-05
    %v826 = vadd.f32 %v824, 1e-05
    %v827 = vrsqrt.pop %v825
    %v828 = vmul.f32 %v827, %v825
    %v829 = vmul.f32 %v828, %v827
    %v830 = vmul.f32 0.5, %v829
    %v831 = vsub.f32 1.5, %v830
    %v832 = vmul.f32 %v827, %v831
    %vm833 = vweird.f32 %v825
    %vm834 = vweird.f32 %v827
    %vm835 = vmor %vm833, %vm834
    %v836 = vsel %vm835, %v827, %v832
    %v837 = vrsqrt.pop %v826
    %v838 = vmul.f32 %v837, %v826
    %v839 = vmul.f32 %v838, %v837
    %v840 = vmul.f32 0.5, %v839
    %v841 = vsub.f32 1.5, %v840
    %v842 = vmul.f32 %v837, %v841
    %vm843 = vweird.f32 %v826
    %vm844 = vweird.f32 %v837
    %vm845 = vmor %vm843, %vm844
    %v846 = vsel %vm845, %v837, %v842
    %v847 = vmul.f32 %v813, %v836
    %v848 = vmul.f32 %v814, %v846
    %v849 = vperm.slane %v57, 6
    %v850 = vmul.f32 %v847, %v849
    %v851 = vmul.f32 %v848, %v849
    %v852 = vperm.slane %v57, 7
    %v853 = vadd.f32 %v850, %v852
    %v854 = vadd.f32 %v851, %v852
    %855 = vst.msk [vmem:[#allocation7] sm:$0xff] %vm76, %v853
    %856 = vst.msk [vmem:[#allocation7 + $0x8] sm:$0xff] %vm76, %v854
    // Predicated region
    $region34: #{transformer_encoder_layer.1} parent=1 // pred_check
      _
    $region35: #{transformer_encoder_layer.1} parent=1 // pred_check_branch
      %858 = sbr.rel (0) target = $region37
    $region36: #{transformer_encoder_layer.1} parent=1 // pred_region
      %860 = vsyncadd [#allocation4], 0
      %s861 = sshll.u32 [#allocation7], 4
      %s862 = int_to_ptr.vmem [resolvable:$true] %s861
      %s863 = sshll.u32 %s6, 4
      %s864 = int_to_ptr.hbm [resolvable:$true] %s863
      %869 = dma.vmem_to_hbm [thread:$0]  %s862, 256, %s864, [#allocation4], 128, 128, 8
    $region37: #{transformer_encoder_layer.1} parent=1 // pred_fallthru
      _
    // Predicated region
    $region38: #{transformer_encoder_layer.1} parent=1 // pred_check
      _
    $region39: #{transformer_encoder_layer.1} parent=1 // pred_check_branch
      %871 = sbr.rel (0) target = $region41
    $region40: #{transformer_encoder_layer.1} parent=1 // pred_region
      %873 = dma.done [#allocation4], 256
    $region41: #{transformer_encoder_layer.1} parent=1 // pred_fallthru
      _
    %874 = vsyncpa [#allocation3], 1
    %875 = vsyncpa [#allocation6], 1
    %876 = vsyncpa [#allocation4], 1

</llo_original>
